<compile_context>
chip_gen: v7x
topology: tpu7x:2x2x1
jax: 0.10.0
libtpu: 0.0.40
codegen_flags: <defaults>
</compile_context>

<pallas_src>
import jax
import jax.numpy as jnp
from jax.experimental import pallas as pl
from jax.experimental.pallas import tpu as pltpu


# --------------------------------------------------------------------------
# Kernel body: a single VPU multiply on a lane-dense tile.
# --------------------------------------------------------------------------
def _apply_mask_kernel(x_ref, m_ref, o_ref):
    # x_ref: (tb, tc) input tile (f32)
    # m_ref: (1, tc)  f32 mask tile, broadcast over sublanes
    # o_ref: (tb, tc) output tile
    o_ref[...] = (x_ref[...] * m_ref[...]).astype(o_ref.dtype)


# --------------------------------------------------------------------------
# Host-side helpers.
# --------------------------------------------------------------------------
def _build_attention_map(h, w, sigma, pow_val, min_scale, max_scale):
    # torch.linspace(-1, 1, n); n == 1 -> [-1.0], matched by jnp.linspace.
    xs = jnp.linspace(-1.0, 1.0, w, dtype=jnp.float32) ** 2          # (w,)
    ys = jnp.linspace(-1.0, 1.0, h, dtype=jnp.float32) ** 2          # (h,)
    am = jnp.exp(-(ys[:, None] + xs[None, :]) / (2.0 * sigma * sigma))
    am = jnp.power(am, pow_val)
    am = min_scale + (max_scale - min_scale) * am
    # PyTorch stores the mask as float16: keep the rounding, hand f32 to the
    # kernel so the hot loop has no per-step convert / packed-f16 load.
    return am.astype(jnp.float16).astype(jnp.float32).reshape(1, h * w)


def _target_block_bytes():
    """Per-block byte budget, generation-aware.

    v7x HBM (~3.2 TB/s per TC) makes the fixed ~0.35us per-step overhead
    relatively larger, so use ~8 MiB blocks there; v5e/v6e are already at the
    roofline plateau around 4 MiB.
    """
    try:
        kind = jax.devices()[0].device_kind.lower()
    except Exception:
        kind = ""
    if ("v7" in kind) or ("tpu7" in kind):
        return 8 << 20
    return 4 << 20


def _choose_tiling(planes, hw_pad, itemsize, target_bytes, min_steps=4):
    """Pick (tb, tc) row/column tiles.

    Constraints honored:
      * tc is a multiple of 128 or equals hw_pad (hw_pad is itself 128-aligned)
      * tb is a multiple of 8 or equals planes
      * block bytes ~= target_bytes
      * total grid steps >= min_steps when the data allows it (pipelining +
        v7x dual-TC sharding).
    """
    rows_for_tc = min(planes, 8)
    row_bytes = hw_pad * itemsize

    # --- column tile (lane axis) ---
    if rows_for_tc * row_bytes <= target_bytes:
        tc = hw_pad
    else:
        tc = max(128, (target_bytes // (rows_for_tc * itemsize * 128)) * 128)
        tc = min(tc, hw_pad)

    # --- row tile (sublane axis) ---
    if planes <= 8:
        tb = planes
    else:
        tb = (target_bytes // max(tc * itemsize, 1)) // 8 * 8
        tb = max(8, min(tb, (planes // 8) * 8))

    # --- keep the grid from collapsing to ~1 step ---
    steps = pl.cdiv(planes, tb) * pl.cdiv(hw_pad, tc)
    if steps < min_steps:
        if planes >= 8 * min_steps:
            tb = max(8, (pl.cdiv(planes, min_steps) // 8) * 8)
        elif hw_pad >= 128 * min_steps and tc == hw_pad:
            tc = max(128, (pl.cdiv(hw_pad, min_steps) // 128) * 128)
    return tb, tc


# --------------------------------------------------------------------------
# Public wrapper.
# --------------------------------------------------------------------------
def center_weighted_mask(x, sigma=0.3, pow_val=1.0, min_scale=0.9,
                         max_scale=1.0, donate_x=False):
    """x: (N, C, H, W) float32  ->  (N, C, H, W) float32."""
    n, c, h, w = x.shape
    planes = n * c
    hw = h * w

    x_flat = x.reshape(planes, hw)
    mask = _build_attention_map(h, w, float(sigma), float(pow_val),
                                float(min_scale), float(max_scale))

    # Lane-dense layout: pad the flattened HW axis to a multiple of 128 so
    # every store is an unmasked vst (single biggest store-path lever).  The
    # pad is a one-time wrapper copy; skipped entirely when hw is aligned.
    hw_pad = ((hw + 127) // 128) * 128
    if hw_pad != hw:
        x_flat = jnp.pad(x_flat, ((0, 0), (0, hw_pad - hw)))
        mask = jnp.pad(mask, ((0, 0), (0, hw_pad - hw)))

    out_dtype = jnp.promote_types(x.dtype, jnp.float16)   # torch promotion
    x_item = x_flat.dtype.itemsize
    o_item = jnp.dtype(out_dtype).itemsize

    target_bytes = _target_block_bytes()
    tb, tc = _choose_tiling(planes, hw_pad, x_item, target_bytes)
    grid = (pl.cdiv(planes, tb), pl.cdiv(hw_pad, tc))

    # VMEM limit from the actual footprint (double-buffered in/out + mask),
    # capped at 48 MiB so there is always headroom under v7x's 64 MiB per-TC.
    block_bytes = tb * tc * (x_item + o_item) + tc * 4
    vmem_limit = int(min(48 << 20, max(2 * block_bytes + (2 << 20), 8 << 20)))

    io_aliases = {}
    if donate_x and x_flat.dtype == out_dtype:
        io_aliases = {0: 0}   # reuse x's buffer for the output

    out_flat = pl.pallas_call(
        _apply_mask_kernel,
        out_shape=jax.ShapeDtypeStruct((planes, hw_pad), out_dtype),
        grid=grid,
        in_specs=[
            pl.BlockSpec((tb, tc), lambda i, j: (i, j)),   # streaming input
            # Constant-row mask block: index only changes with j, so Pallas
            # skips the re-DMA across the (inner) row sweep; tiny either way.
            pl.BlockSpec((1, tc), lambda i, j: (0, j)),
        ],
        out_specs=pl.BlockSpec((tb, tc), lambda i, j: (i, j)),
        input_output_aliases=io_aliases,
        compiler_params=pltpu.CompilerParams(
            # Both axes independent -> shardable across TCs on v7x; no-op on
            # single-TC v5e/v6e.
            dimension_semantics=("parallel", "parallel"),
            vmem_limit_bytes=vmem_limit,
        ),
    )(x_flat, mask)

    if hw_pad != hw:
        out_flat = out_flat[:, :hw]
    return out_flat.reshape(n, c, h, w)


# --------------------------------------------------------------------------
# Pure-JAX reference (mirrors the PyTorch module exactly).
# --------------------------------------------------------------------------
def _reference(x, sigma=0.3, pow_val=1.0, min_scale=0.9, max_scale=1.0):
    n, c, h, w = x.shape
    xs = jnp.linspace(-1.0, 1.0, w, dtype=jnp.float32).reshape(1, 1, 1, w) ** 2
    ys = jnp.linspace(-1.0, 1.0, h, dtype=jnp.float32).reshape(1, 1, h, 1) ** 2
    am = jnp.exp(-(xs + ys) / (2.0 * sigma**2))
    am = jnp.power(am, pow_val)
    am = min_scale + (max_scale - min_scale) * am
    am = am.astype(jnp.float16).astype(jnp.float32)
    return x * am


if __name__ == "__main__":
    key = jax.random.PRNGKey(0)
    x = jax.random.normal(key, (2, 4, 16, 16), dtype=jnp.float32)

    out = center_weighted_mask(x)
    out = jax.block_until_ready(out)

    ref = _reference(x)
    assert out.shape == x.shape and out.dtype == x.dtype
    assert jnp.allclose(out, ref, atol=1e-5, rtol=1e-5), "mismatch vs reference"

    # Also exercise a non-128-multiple spatial size to hit the padding path.
    x2 = jax.random.normal(jax.random.PRNGKey(1), (2, 3, 14, 14), jnp.float32)
    out2 = jax.block_until_ready(center_weighted_mask(x2))
    assert jnp.allclose(out2, _reference(x2), atol=1e-5, rtol=1e-5)

    print("KERNEL_OK")
</pallas_src>

<mosaic_0001>
module attributes {stable_mosaic.version = 11 : i64} {
  func.func @_apply_mask_kernel(%arg0: i32, %arg1: i32, %arg2: memref<8x256xf32, #tpu.memory_space<vmem>>, %arg3: memref<1x256xf32, #tpu.memory_space<vmem>>, %arg4: memref<8x256xf32, #tpu.memory_space<vmem>>) attributes {dimension_semantics = [#tpu.dimension_semantics<parallel>, #tpu.dimension_semantics<parallel>], iteration_bounds = array<i64: 1, 1>, scalar_prefetch = 0 : i64, scratch_operands = 0 : i64, tpu.core_type = #tpu.core_type<tc>, window_params = [{transform_indices = @transform_0, window_bounds = array<i64: 8, 256>}, {transform_indices = @transform_1, window_bounds = array<i64: 1, 256>}, {transform_indices = @transform_2, window_bounds = array<i64: 8, 256>}]} {
    %c0 = arith.constant 0 : index
    %c0_0 = arith.constant 0 : index
    %0 = vector.load %arg2[%c0, %c0_0] : memref<8x256xf32, #tpu.memory_space<vmem>>, vector<8x256xf32>
    %c0_1 = arith.constant 0 : index
    %c0_2 = arith.constant 0 : index
    %1 = vector.load %arg3[%c0_1, %c0_2] : memref<1x256xf32, #tpu.memory_space<vmem>>, vector<1x256xf32>
    %2 = vector.broadcast %1 : vector<1x256xf32> to vector<8x256xf32>
    %3 = arith.mulf %0, %2 : vector<8x256xf32>
    %c0_3 = arith.constant 0 : index
    %c0_4 = arith.constant 0 : index
    %4 = vector.load %arg4[%c0_3, %c0_4] : memref<8x256xf32, #tpu.memory_space<vmem>>, vector<8x256xf32>
    tpu.vector_store %arg4[%c0_3, %c0_4], %3 {strides = array<i32>} : memref<8x256xf32, #tpu.memory_space<vmem>>, vector<8x256xf32>,
    return
  }
  func.func @transform_0(%arg0: i32, %arg1: i32) -> (i32, i32) {
    %c0_i32 = arith.constant 0 : i32
    return %arg0, %arg1 : i32, i32
  }
  func.func @transform_1(%arg0: i32, %arg1: i32) -> (i32, i32) {
    %c0_i32 = arith.constant 0 : i32
    %c0_i32_0 = arith.constant 0 : i32
    return %c0_i32, %arg1 : i32, i32
  }
  func.func @transform_2(%arg0: i32, %arg1: i32) -> (i32, i32) {
    %c0_i32 = arith.constant 0 : i32
    return %arg0, %arg1 : i32, i32
  }
}

</mosaic_0001>

<llo_original>
// kernel: tpu_custom_call.1
$region0: #{tpu_custom_call.1}
  #allocation0 [shape = 'u32[]', space=smem, size = 0x4, offset = 0x4, fixed_abs, tag = 'smem constant byte address 0x4 - core index']
  #allocation1 [shape = 'u32[144,128]{1,0:T(1,128)}', space=vmem, size = 0x12000, scoped, tag = 'internal scratch']
  %s0 = inlined_call_operand.hbm [shape: f32[8,256], index: 0, kind: input, shape index: {}]
  %s1 = inlined_call_operand.vmem [shape: f32[1,256], index: 1, kind: input, shape index: {}]
  %s2 = inlined_call_operand.hbm [shape: f32[8,256], index: 2, kind: output, shape index: {}]
  %s3 = sld [smem:[#allocation0]]
  $region22: #{tpu_custom_call.1} parent=0
    _
  %s5 = ssub.s32 1, %s3
  %s6 = scalar_select 0, %s5, %s3
  $region1: #{tpu_custom_call.1} parent=0
    #allocation2 [shape = 'u8[8192]{0}', space=vmem, size = 0x2000, scoped, tag = 'input window, operand 0, single buffered']
    #allocation3 [shape = 's32[1]{0}', space=sflag, size = 0x4, scoped, tag = 'scoped memory for tpu_custom_call.1']
    #allocation4 [shape = 's32[1]{0}', space=sflag, size = 0x4, scoped, tag = 'scoped memory for tpu_custom_call.1']
    #allocation5 [shape = 'u8[8192]{0}', space=vmem, size = 0x2000, scoped, tag = 'output window, operand 0, single buffered']
    %7 = vsyncpa [#allocation3], 0
    %8 = vsyncpa [#allocation4], 0
    // Predicated region
    $region2: #{tpu_custom_call.1} parent=1 // pred_check
      _
    $region3: #{tpu_custom_call.1} parent=1 // pred_check_branch
      %10 = sbr.rel (0) target = $region5
    $region4: #{tpu_custom_call.1} parent=1 // pred_region
      %s12 = ssub.s32 256, 256
      %13 = vsyncadd [#allocation3], %s12
      %s15 = sshll.u32 [#allocation2], 4
      %s16 = int_to_ptr.vmem [resolvable:$true] %s15
      %18 = dma.hbm_to_vmem [thread:$0]  %s0, 256, %s16, [#allocation3]
    $region5: #{tpu_custom_call.1} parent=1 // pred_fallthru
      _
    // Predicated region
    $region6: #{tpu_custom_call.1} parent=1 // pred_check
      _
    $region7: #{tpu_custom_call.1} parent=1 // pred_check_branch
      %20 = sbr.rel (0) target = $region9
    $region8: #{tpu_custom_call.1} parent=1 // pred_region
      _
    $region9: #{tpu_custom_call.1} parent=1 // pred_fallthru
      _
    // Predicated region
    $region10: #{tpu_custom_call.1} parent=1 // pred_check
      _
    $region11: #{tpu_custom_call.1} parent=1 // pred_check_branch
      %22 = sbr.rel (0) target = $region13
    $region12: #{tpu_custom_call.1} parent=1 // pred_region
      %23 = dma.done [#allocation3], 256
    $region13: #{tpu_custom_call.1} parent=1 // pred_fallthru
      _
    %v24 = vld [vmem:[#allocation2] sm:$0xff]
    %v25 = vld [vmem:[#allocation2 + $0x8] sm:$0xff]
    %v26 = vld [vmem:[%s1] sm:$0x3]
    %v28 = vlaneseq
    %v29 = vshrl.u32 %v28, 7
    %v30 = vsub.s32 0, %v29
    %v31 = vrot.slane %v26, %v30
    %v32 = vlaneseq
    %v33 = vshrl.u32 %v32, 7
    %v34 = vsub.s32 1, %v33
    %v35 = vrot.slane %v26, %v34
    %v38 = vmul.f32 %v24, %v31
    %v39 = vmul.f32 %v25, %v35
    %40 = vst [vmem:[#allocation5] sm:$0xff] %v38
    %41 = vst [vmem:[#allocation5 + $0x8] sm:$0xff] %v39
    // Predicated region
    $region14: #{tpu_custom_call.1} parent=1 // pred_check
      _
    $region15: #{tpu_custom_call.1} parent=1 // pred_check_branch
      %43 = sbr.rel (0) target = $region17
    $region16: #{tpu_custom_call.1} parent=1 // pred_region
      %s45 = ssub.s32 256, 256
      %46 = vsyncadd [#allocation4], %s45
      %s48 = sshll.u32 [#allocation5], 4
      %s49 = int_to_ptr.vmem [resolvable:$true] %s48
      %51 = dma.vmem_to_hbm [thread:$0]  %s49, 256, %s2, [#allocation4]
    $region17: #{tpu_custom_call.1} parent=1 // pred_fallthru
      _
    // Predicated region
    $region18: #{tpu_custom_call.1} parent=1 // pred_check
      _
    $region19: #{tpu_custom_call.1} parent=1 // pred_check_branch
      %53 = sbr.rel (0) target = $region21
    $region20: #{tpu_custom_call.1} parent=1 // pred_region
      %54 = dma.done [#allocation4], 256
    $region21: #{tpu_custom_call.1} parent=1 // pred_fallthru
      _
    %55 = vsyncpa [#allocation3], 1
    %56 = vsyncpa [#allocation4], 1

</llo_original>
